<compile_context>
chip_gen: v7x
topology: tpu7x:2x2x1
jax: 0.10.0
libtpu: 0.0.40
codegen_flags: <defaults>
</compile_context>

<pallas_src>
import jax
import jax.numpy as jnp
import numpy as np
from jax.experimental import pallas as pl
from jax.experimental.pallas import tpu as pltpu


# --------------------------------------------------------------------------- #
# Kernel
# --------------------------------------------------------------------------- #
def _make_kernel(TT, H, W, OUT, padding, mxu_dtype):
    inv_scale = 1.0 / (1.0 + padding + 1e-5)
    eps = 1e-5
    wm1 = float(W - 1)
    hm1 = float(H - 1)
    # grid_sample's 'x' grid coordinate indexes the plane's W axis, 'y' its H axis.
    PLANE_DIMS = ((0, 2), (0, 1), (1, 2))   # 'xz', 'xy', 'yz'

    def _pix(row, scale, hi):
        # normalize_coordinate + align_corners=True pixel coordinate, border clamp.
        u = row * inv_scale + 0.5
        u = jnp.where(u >= 1.0, 1.0 - eps, u)
        u = jnp.where(u < 0.0, 0.0, u)
        return jnp.clip(u * scale, 0.0, hi)

    def kernel(p_ref, planes_ref, wp_ref, b_ref, out_ref):
        p3 = p_ref[0]                                            # (3, TT) f32

        # Tiny hoisted index columns (no //W %W, built once per grid step).
        wi = jax.lax.broadcasted_iota(jnp.int32, (W, 1), 0).astype(jnp.float32)
        hi = jax.lax.broadcasted_iota(jnp.int32, (H, 1), 0).astype(jnp.float32)

        acc = jnp.zeros((OUT, TT), jnp.float32)
        for d, (dx, dy) in enumerate(PLANE_DIMS):
            ix = _pix(p3[dx:dx + 1, :], wm1, wm1)                # (1, TT)
            iy = _pix(p3[dy:dy + 1, :], hm1, hm1)                # (1, TT)
            # Separable tent weights == border-clamped bilinear weights (exact).
            mx = jnp.maximum(1.0 - jnp.abs(wi - ix), 0.0)        # (W, TT)
            my = jnp.maximum(1.0 - jnp.abs(hi - iy), 0.0)        # (H, TT) f32 (VPU)
            # W-contraction on the MXU against the fc-folded plane features.
            g = jnp.dot(planes_ref[0, d], mx.astype(mxu_dtype),
                        preferred_element_type=jnp.float32)      # (OUT*H, TT) f32
            # H-contraction: per-lane tent weights -> VPU multiply + sublane reduce.
            if OUT == 1:
                acc = acc + jnp.sum(g * my, axis=0, keepdims=True)
            else:
                acc = acc + jnp.sum(g.reshape(OUT, H, TT) * my[None], axis=1)

        # fc contribution of the raw coordinates + bias.
        if OUT == 1:
            acc = acc + jnp.sum(p3 * wp_ref[...], axis=0, keepdims=True)
        else:
            acc = acc + jax.lax.dot_general(
                wp_ref[...], p3, (((0,), (0,)), ((), ())),
                preferred_element_type=jnp.float32)              # (OUT, TT)

        out_ref[0] = (acc + b_ref[...]).astype(out_ref.dtype)

    return kernel


# --------------------------------------------------------------------------- #
# Wrapper
# --------------------------------------------------------------------------- #
def fold_planes(c_plane, w_c, dtype=jnp.bfloat16):
    """Fold fc channel weights into the NCHW feature planes (f32), then cast.

    fused[b, d, o*H + h, w] = sum_c w_c[o, c] * plane_d[b, c, h, w]
    Hoist this out of the per-query path when the same c_plane is decoded
    repeatedly -- it is one memory-bound pass over the feature planes.
    """
    xz, xy, yz = c_plane['xz'], c_plane['xy'], c_plane['yz']
    B, C, H, W = xz.shape
    assert xy.shape == (B, C, H, W) and yz.shape == (B, C, H, W), \
        "example assumes equal plane resolutions"
    planes = jnp.stack([xz, xy, yz], axis=1).astype(jnp.float32)      # (B,3,C,H,W)
    fused = jnp.einsum('oc,bdchw->bdohw', w_c.astype(jnp.float32), planes)
    OUT = w_c.shape[0]
    return fused.reshape(B, 3, OUT * H, W).astype(dtype), H, W


def _pick_tile_T(T, B):
    """Lane-dense T tile.  After the fc fold + separable tents the per-tile VMEM
    footprint is a few (H|W, TT) f32 temporaries, so a large tile is safe on every
    generation (incl. v7x's 64 MiB VMEM).  Only shrink to guarantee >= 2 grid
    steps so both v7x TensorCores get work when B == 1."""
    t128 = pl.cdiv(T, 128) * 128
    tt = min(1024, t128)
    if B == 1 and tt == t128 and t128 > 128:
        tt = max(128, (t128 // 2 // 128) * 128)
    return tt


def fc_decoder_pallas(p, c_plane, weight, bias, padding=0.1,
                      mxu_dtype=jnp.bfloat16):
    """p: (B, T, 3) f32; c_plane: dict 'xz'/'xy'/'yz' -> (B, C, H, W) NCHW f32;
    weight: (OUT, C+3) torch Linear layout; bias: (OUT,).
    Returns (B, T) when OUT == 1 (matches torch .squeeze(-1)), else (B, T, OUT)."""
    B, T, dim = p.shape
    assert dim == 3
    OUT, CD = weight.shape
    C = CD - dim
    if 'grid' in c_plane:
        raise NotImplementedError("TODO(synk): 'grid' trilinear branch")
    assert c_plane['xz'].shape[1] == C, "weight/in-channel mismatch"

    # Fold the Linear's channel weights into the planes (f32), cast afterwards.
    fused, H, W = fold_planes(c_plane, weight[:, :C], mxu_dtype)  # (B,3,OUT*H,W)

    TT = _pick_tile_T(T, B)
    T_pad = pl.cdiv(T, TT) * TT
    n_t = T_pad // TT

    pT = jnp.transpose(jnp.asarray(p, jnp.float32), (0, 2, 1))   # (B, 3, T)
    if T_pad != T:
        pT = jnp.pad(pT, ((0, 0), (0, 0), (0, T_pad - T)))       # zero coords are safe
    wp = jnp.asarray(weight[:, C:].T, jnp.float32)               # (3, OUT)
    b = jnp.asarray(bias, jnp.float32).reshape(OUT, 1)           # (OUT, 1)

    kernel = _make_kernel(TT, H, W, OUT, padding, mxu_dtype)

    flops = 2 * B * T_pad * 3 * OUT * H * W + 2 * B * T_pad * OUT * 3
    bytes_accessed = (fused.size * fused.dtype.itemsize + pT.size * 4
                      + B * OUT * T_pad * 4 + (wp.size + b.size) * 4)

    out = pl.pallas_call(
        kernel,
        out_shape=jax.ShapeDtypeStruct((B, OUT, T_pad), jnp.float32),
        grid=(B, n_t),
        in_specs=[
            pl.BlockSpec((1, 3, TT), lambda b_, t_: (b_, 0, t_)),           # p (B,3,T)
            pl.BlockSpec((1, 3, OUT * H, W), lambda b_, t_: (b_, 0, 0, 0)),  # fused planes (resident over t)
            pl.BlockSpec((3, OUT), lambda b_, t_: (0, 0)),                   # Wp
            pl.BlockSpec((OUT, 1), lambda b_, t_: (0, 0)),                   # bias
        ],
        out_specs=pl.BlockSpec((1, OUT, TT), lambda b_, t_: (b_, 0, t_)),
        compiler_params=pltpu.CompilerParams(
            dimension_semantics=("parallel", "parallel")),
        cost_estimate=pl.CostEstimate(flops=flops, transcendentals=0,
                                      bytes_accessed=bytes_accessed),
    )(pT, fused, wp, b)

    out = out[:, :, :T]
    if OUT == 1:
        return out.reshape(B, T)                  # matches torch .squeeze(-1)
    return jnp.transpose(out, (0, 2, 1))          # (B, T, OUT)


# ---------------- pure-JAX reference (mirrors the PyTorch module) ---------------- #
def _ref_sample_plane(p, plane, dims, padding):
    eps = 1e-5
    xy = p[:, :, dims]                                   # (B, T, 2)
    xy = xy / (1.0 + padding + eps) + 0.5
    xy = jnp.where(xy >= 1.0, 1.0 - eps, xy)
    xy = jnp.where(xy < 0.0, 0.0, xy)
    _, _, H, W = plane.shape
    ix = jnp.clip(xy[..., 0] * (W - 1), 0.0, W - 1.0)
    iy = jnp.clip(xy[..., 1] * (H - 1), 0.0, H - 1.0)
    x0f = jnp.floor(ix); y0f = jnp.floor(iy)
    wx = ix - x0f; wy = iy - y0f
    x0 = x0f.astype(jnp.int32); y0 = y0f.astype(jnp.int32)
    x1 = jnp.minimum(x0 + 1, W - 1); y1 = jnp.minimum(y0 + 1, H - 1)

    def g(pb, yy, xx):
        return pb[:, yy, xx]                              # (C, T)

    gv = jax.vmap(g)
    v00 = gv(plane, y0, x0); v01 = gv(plane, y0, x1)
    v10 = gv(plane, y1, x0); v11 = gv(plane, y1, x1)
    wxe = wx[:, None, :]; wye = wy[:, None, :]
    return (v00 * (1 - wye) * (1 - wxe) + v01 * (1 - wye) * wxe
            + v10 * wye * (1 - wxe) + v11 * wye * wxe)    # (B, C, T)


def fc_decoder_reference(p, c_plane, weight, bias, padding=0.1):
    c = _ref_sample_plane(p, c_plane['xz'], [0, 2], padding)
    c = c + _ref_sample_plane(p, c_plane['xy'], [0, 1], padding)
    c = c + _ref_sample_plane(p, c_plane['yz'], [1, 2], padding)
    c = jnp.transpose(c, (0, 2, 1))                       # (B, T, C)
    x = jnp.concatenate([c, p], axis=2)
    net = x @ weight.T + bias                             # (B, T, OUT)
    if weight.shape[0] == 1:
        return net[..., 0]
    return net


if __name__ == "__main__":
    B, T, dim = 2, 8, 3
    c_dim, H, W = 32, 8, 8
    padding = 0.1

    key = jax.random.PRNGKey(0)
    kp, kxz, kxy, kyz, kw, kb, kw4, kb4 = jax.random.split(key, 8)

    p = jax.random.uniform(kp, (B, T, dim), jnp.float32, minval=-0.5, maxval=0.5)
    c_plane = {
        'xz': jax.random.normal(kxz, (B, c_dim, H, W), jnp.float32),
        'xy': jax.random.normal(kxy, (B, c_dim, H, W), jnp.float32),
        'yz': jax.random.normal(kyz, (B, c_dim, H, W), jnp.float32),
    }

    # ---- out_dim == 1 (default FCDecoder config) ----
    # nn.Linear(dim + c_dim, out_dim): weight (out_dim, dim + c_dim), bias (out_dim,)
    weight = 0.1 * jax.random.normal(kw, (1, dim + c_dim), jnp.float32)
    bias = 0.1 * jax.random.normal(kb, (1,), jnp.float32)
    ref = jax.block_until_ready(fc_decoder_reference(p, c_plane, weight, bias, padding))

    # Exact (f32 MXU) run: tight check of kernel logic.
    out_f32 = jax.block_until_ready(
        fc_decoder_pallas(p, c_plane, weight, bias, padding, mxu_dtype=jnp.float32))
    assert out_f32.shape == (B, T), out_f32.shape
    np.testing.assert_allclose(np.asarray(out_f32), np.asarray(ref),
                               rtol=1e-4, atol=1e-4)

    # Default (bf16 MXU) run: loose tolerance for the bf16 plane/tent operands.
    out_bf16 = jax.block_until_ready(
        fc_decoder_pallas(p, c_plane, weight, bias, padding))
    assert out_bf16.shape == (B, T), out_bf16.shape
    np.testing.assert_allclose(np.asarray(out_bf16), np.asarray(ref),
                               rtol=5e-2, atol=5e-2)

    # ---- out_dim > 1 (general path, previously flagged as untested) ----
    weight4 = 0.1 * jax.random.normal(kw4, (4, dim + c_dim), jnp.float32)
    bias4 = 0.1 * jax.random.normal(kb4, (4,), jnp.float32)
    ref4 = jax.block_until_ready(fc_decoder_reference(p, c_plane, weight4, bias4, padding))
    out4 = jax.block_until_ready(
        fc_decoder_pallas(p, c_plane, weight4, bias4, padding, mxu_dtype=jnp.float32))
    assert out4.shape == (B, T, 4), out4.shape
    np.testing.assert_allclose(np.asarray(out4), np.asarray(ref4),
                               rtol=1e-4, atol=1e-4)

    print("KERNEL_OK")
</pallas_src>

<mosaic_0001>
module attributes {stable_mosaic.version = 11 : i64} {
  func.func @kernel(%arg0: i32, %arg1: i32, %arg2: memref<1x3x128xf32, #tpu.memory_space<vmem>>, %arg3: memref<1x3x8x8xf32, #tpu.memory_space<vmem>>, %arg4: memref<3x1xf32, #tpu.memory_space<vmem>>, %arg5: memref<1x1xf32, #tpu.memory_space<vmem>>, %arg6: memref<1x1x128xf32, #tpu.memory_space<vmem>>) attributes {dimension_semantics = [#tpu.dimension_semantics<parallel>, #tpu.dimension_semantics<parallel>], iteration_bounds = array<i64: 2, 1>, scalar_prefetch = 0 : i64, scratch_operands = 0 : i64, tpu.core_type = #tpu.core_type<tc>, window_params = [{transform_indices = @transform_0, window_bounds = array<i64: 1, 3, 128>}, {transform_indices = @transform_1, window_bounds = array<i64: 1, 3, 8, 8>}, {pipeline_mode = #tpu.pipeline_mode<synchronous>, transform_indices = @transform_2, window_bounds = array<i64: 3, 1>}, {pipeline_mode = #tpu.pipeline_mode<synchronous>, transform_indices = @transform_3, window_bounds = array<i64: 1, 1>}, {transform_indices = @transform_4, window_bounds = array<i64: 1, 1, 128>}]} {
    %c0 = arith.constant 0 : index
    %c0_0 = arith.constant 0 : index
    %c0_1 = arith.constant 0 : index
    %0 = vector.load %arg2[%c0, %c0_0, %c0_1] : memref<1x3x128xf32, #tpu.memory_space<vmem>>, vector<1x3x128xf32>
    %1 = vector.shape_cast %0 : vector<1x3x128xf32> to vector<3x128xf32>
    %2 = tpu.iota {dimensions = array<i32: 0>} : vector<8x1xi32>
    %3 = arith.sitofp %2 : vector<8x1xi32> to vector<8x1xf32>
    %4 = tpu.iota {dimensions = array<i32: 0>} : vector<8x1xi32>
    %5 = arith.sitofp %4 : vector<8x1xi32> to vector<8x1xf32>
    %cst = arith.constant 0.000000e+00 : f32
    %6 = vector.broadcast %cst : f32 to vector<1x128xf32>
    %7 = vector.extract_strided_slice %1 {offsets = [0, 0], sizes = [1, 128], strides = [1, 1]} : vector<3x128xf32> to vector<1x128xf32>
    %cst_2 = arith.constant 0.909082651 : f32
    %8 = vector.broadcast %cst_2 : f32 to vector<1x128xf32>
    %9 = arith.mulf %7, %8 : vector<1x128xf32>
    %cst_3 = arith.constant 5.000000e-01 : f32
    %10 = vector.broadcast %cst_3 : f32 to vector<1x128xf32>
    %11 = arith.addf %9, %10 : vector<1x128xf32>
    %cst_4 = arith.constant 1.000000e+00 : f32
    %12 = vector.broadcast %cst_4 : f32 to vector<1x128xf32>
    %13 = arith.cmpf oge, %11, %12 : vector<1x128xf32>
    %cst_5 = arith.constant 0.999989986 : f32
    %14 = vector.broadcast %cst_5 : f32 to vector<1x128xf32>
    %15 = arith.select %13, %14, %11 : vector<1x128xi1>, vector<1x128xf32>
    %cst_6 = arith.constant 0.000000e+00 : f32
    %16 = vector.broadcast %cst_6 : f32 to vector<1x128xf32>
    %17 = arith.cmpf olt, %15, %16 : vector<1x128xf32>
    %cst_7 = arith.constant 0.000000e+00 : f32
    %18 = vector.broadcast %cst_7 : f32 to vector<1x128xf32>
    %19 = arith.select %17, %18, %15 : vector<1x128xi1>, vector<1x128xf32>
    %cst_8 = arith.constant 7.000000e+00 : f32
    %20 = vector.broadcast %cst_8 : f32 to vector<1x128xf32>
    %21 = arith.mulf %19, %20 : vector<1x128xf32>
    %cst_9 = arith.constant 0.000000e+00 : f32
    %cst_10 = arith.constant 7.000000e+00 : f32
    %22 = vector.broadcast %cst_9 : f32 to vector<1x128xf32>
    %23 = arith.maximumf %22, %21 : vector<1x128xf32>
    %24 = vector.broadcast %cst_10 : f32 to vector<1x128xf32>
    %25 = arith.minimumf %24, %23 : vector<1x128xf32>
    %26 = vector.extract_strided_slice %1 {offsets = [2, 0], sizes = [1, 128], strides = [1, 1]} : vector<3x128xf32> to vector<1x128xf32>
    %cst_11 = arith.constant 0.909082651 : f32
    %27 = vector.broadcast %cst_11 : f32 to vector<1x128xf32>
    %28 = arith.mulf %26, %27 : vector<1x128xf32>
    %cst_12 = arith.constant 5.000000e-01 : f32
    %29 = vector.broadcast %cst_12 : f32 to vector<1x128xf32>
    %30 = arith.addf %28, %29 : vector<1x128xf32>
    %cst_13 = arith.constant 1.000000e+00 : f32
    %31 = vector.broadcast %cst_13 : f32 to vector<1x128xf32>
    %32 = arith.cmpf oge, %30, %31 : vector<1x128xf32>
    %cst_14 = arith.constant 0.999989986 : f32
    %33 = vector.broadcast %cst_14 : f32 to vector<1x128xf32>
    %34 = arith.select %32, %33, %30 : vector<1x128xi1>, vector<1x128xf32>
    %cst_15 = arith.constant 0.000000e+00 : f32
    %35 = vector.broadcast %cst_15 : f32 to vector<1x128xf32>
    %36 = arith.cmpf olt, %34, %35 : vector<1x128xf32>
    %cst_16 = arith.constant 0.000000e+00 : f32
    %37 = vector.broadcast %cst_16 : f32 to vector<1x128xf32>
    %38 = arith.select %36, %37, %34 : vector<1x128xi1>, vector<1x128xf32>
    %cst_17 = arith.constant 7.000000e+00 : f32
    %39 = vector.broadcast %cst_17 : f32 to vector<1x128xf32>
    %40 = arith.mulf %38, %39 : vector<1x128xf32>
    %cst_18 = arith.constant 0.000000e+00 : f32
    %cst_19 = arith.constant 7.000000e+00 : f32
    %41 = vector.broadcast %cst_18 : f32 to vector<1x128xf32>
    %42 = arith.maximumf %41, %40 : vector<1x128xf32>
    %43 = vector.broadcast %cst_19 : f32 to vector<1x128xf32>
    %44 = arith.minimumf %43, %42 : vector<1x128xf32>
    %45 = vector.broadcast %3 : vector<8x1xf32> to vector<8x128xf32>
    %46 = vector.broadcast %25 : vector<1x128xf32> to vector<8x128xf32>
    %47 = arith.subf %45, %46 : vector<8x128xf32>
    %48 = math.absf %47 : vector<8x128xf32>
    %cst_20 = arith.constant 1.000000e+00 : f32
    %49 = vector.broadcast %cst_20 : f32 to vector<8x128xf32>
    %50 = arith.subf %49, %48 : vector<8x128xf32>
    %cst_21 = arith.constant 0.000000e+00 : f32
    %51 = vector.broadcast %cst_21 : f32 to vector<8x128xf32>
    %52 = arith.maximumf %50, %51 : vector<8x128xf32>
    %53 = vector.broadcast %5 : vector<8x1xf32> to vector<8x128xf32>
    %54 = vector.broadcast %44 : vector<1x128xf32> to vector<8x128xf32>
    %55 = arith.subf %53, %54 : vector<8x128xf32>
    %56 = math.absf %55 : vector<8x128xf32>
    %cst_22 = arith.constant 1.000000e+00 : f32
    %57 = vector.broadcast %cst_22 : f32 to vector<8x128xf32>
    %58 = arith.subf %57, %56 : vector<8x128xf32>
    %cst_23 = arith.constant 0.000000e+00 : f32
    %59 = vector.broadcast %cst_23 : f32 to vector<8x128xf32>
    %60 = arith.maximumf %58, %59 : vector<8x128xf32>
    %c0_24 = arith.constant 0 : index
    %c0_25 = arith.constant 0 : index
    %c0_26 = arith.constant 0 : index
    %c0_27 = arith.constant 0 : index
    %61 = vector.load %arg3[%c0_24, %c0_25, %c0_26, %c0_27] : memref<1x3x8x8xf32, #tpu.memory_space<vmem>>, vector<1x1x8x8xf32>
    %62 = vector.shape_cast %61 : vector<1x1x8x8xf32> to vector<8x8xf32>
    %cst_28 = arith.constant dense<0.000000e+00> : vector<8x128xf32>
    %63 = tpu.matmul %62, %52, %cst_28 {dimension_numbers = #tpu.dot_dimension_numbers<[1], [0], [0], [1], [0, 0, 1, 1], [], []>} : vector<8x8xf32>, vector<8x128xf32>, vector<8x128xf32> -> vector<8x128xf32>
    %64 = arith.mulf %63, %60 : vector<8x128xf32>
    %cst_29 = arith.constant dense<0.000000e+00> : vector<128xf32>
    %65 = vector.multi_reduction <add>, %64, %cst_29 [0] : vector<8x128xf32> to vector<128xf32>
    %66 = vector.shape_cast %65 : vector<128xf32> to vector<1x128xf32>
    %67 = arith.addf %6, %66 : vector<1x128xf32>
    %68 = vector.extract_strided_slice %1 {offsets = [0, 0], sizes = [1, 128], strides = [1, 1]} : vector<3x128xf32> to vector<1x128xf32>
    %cst_30 = arith.constant 0.909082651 : f32
    %69 = vector.broadcast %cst_30 : f32 to vector<1x128xf32>
    %70 = arith.mulf %68, %69 : vector<1x128xf32>
    %cst_31 = arith.constant 5.000000e-01 : f32
    %71 = vector.broadcast %cst_31 : f32 to vector<1x128xf32>
    %72 = arith.addf %70, %71 : vector<1x128xf32>
    %cst_32 = arith.constant 1.000000e+00 : f32
    %73 = vector.broadcast %cst_32 : f32 to vector<1x128xf32>
    %74 = arith.cmpf oge, %72, %73 : vector<1x128xf32>
    %cst_33 = arith.constant 0.999989986 : f32
    %75 = vector.broadcast %cst_33 : f32 to vector<1x128xf32>
    %76 = arith.select %74, %75, %72 : vector<1x128xi1>, vector<1x128xf32>
    %cst_34 = arith.constant 0.000000e+00 : f32
    %77 = vector.broadcast %cst_34 : f32 to vector<1x128xf32>
    %78 = arith.cmpf olt, %76, %77 : vector<1x128xf32>
    %cst_35 = arith.constant 0.000000e+00 : f32
    %79 = vector.broadcast %cst_35 : f32 to vector<1x128xf32>
    %80 = arith.select %78, %79, %76 : vector<1x128xi1>, vector<1x128xf32>
    %cst_36 = arith.constant 7.000000e+00 : f32
    %81 = vector.broadcast %cst_36 : f32 to vector<1x128xf32>
    %82 = arith.mulf %80, %81 : vector<1x128xf32>
    %cst_37 = arith.constant 0.000000e+00 : f32
    %cst_38 = arith.constant 7.000000e+00 : f32
    %83 = vector.broadcast %cst_37 : f32 to vector<1x128xf32>
    %84 = arith.maximumf %83, %82 : vector<1x128xf32>
    %85 = vector.broadcast %cst_38 : f32 to vector<1x128xf32>
    %86 = arith.minimumf %85, %84 : vector<1x128xf32>
    %87 = vector.extract_strided_slice %1 {offsets = [1, 0], sizes = [1, 128], strides = [1, 1]} : vector<3x128xf32> to vector<1x128xf32>
    %cst_39 = arith.constant 0.909082651 : f32
    %88 = vector.broadcast %cst_39 : f32 to vector<1x128xf32>
    %89 = arith.mulf %87, %88 : vector<1x128xf32>
    %cst_40 = arith.constant 5.000000e-01 : f32
    %90 = vector.broadcast %cst_40 : f32 to vector<1x128xf32>
    %91 = arith.addf %89, %90 : vector<1x128xf32>
    %cst_41 = arith.constant 1.000000e+00 : f32
    %92 = vector.broadcast %cst_41 : f32 to vector<1x128xf32>
    %93 = arith.cmpf oge, %91, %92 : vector<1x128xf32>
    %cst_42 = arith.constant 0.999989986 : f32
    %94 = vector.broadcast %cst_42 : f32 to vector<1x128xf32>
    %95 = arith.select %93, %94, %91 : vector<1x128xi1>, vector<1x128xf32>
    %cst_43 = arith.constant 0.000000e+00 : f32
    %96 = vector.broadcast %cst_43 : f32 to vector<1x128xf32>
    %97 = arith.cmpf olt, %95, %96 : vector<1x128xf32>
    %cst_44 = arith.constant 0.000000e+00 : f32
    %98 = vector.broadcast %cst_44 : f32 to vector<1x128xf32>
    %99 = arith.select %97, %98, %95 : vector<1x128xi1>, vector<1x128xf32>
    %cst_45 = arith.constant 7.000000e+00 : f32
    %100 = vector.broadcast %cst_45 : f32 to vector<1x128xf32>
    %101 = arith.mulf %99, %100 : vector<1x128xf32>
    %cst_46 = arith.constant 0.000000e+00 : f32
    %cst_47 = arith.constant 7.000000e+00 : f32
    %102 = vector.broadcast %cst_46 : f32 to vector<1x128xf32>
    %103 = arith.maximumf %102, %101 : vector<1x128xf32>
    %104 = vector.broadcast %cst_47 : f32 to vector<1x128xf32>
    %105 = arith.minimumf %104, %103 : vector<1x128xf32>
    %106 = vector.broadcast %3 : vector<8x1xf32> to vector<8x128xf32>
    %107 = vector.broadcast %86 : vector<1x128xf32> to vector<8x128xf32>
    %108 = arith.subf %106, %107 : vector<8x128xf32>
    %109 = math.absf %108 : vector<8x128xf32>
    %cst_48 = arith.constant 1.000000e+00 : f32
    %110 = vector.broadcast %cst_48 : f32 to vector<8x128xf32>
    %111 = arith.subf %110, %109 : vector<8x128xf32>
    %cst_49 = arith.constant 0.000000e+00 : f32
    %112 = vector.broadcast %cst_49 : f32 to vector<8x128xf32>
    %113 = arith.maximumf %111, %112 : vector<8x128xf32>
    %114 = vector.broadcast %5 : vector<8x1xf32> to vector<8x128xf32>
    %115 = vector.broadcast %105 : vector<1x128xf32> to vector<8x128xf32>
    %116 = arith.subf %114, %115 : vector<8x128xf32>
    %117 = math.absf %116 : vector<8x128xf32>
    %cst_50 = arith.constant 1.000000e+00 : f32
    %118 = vector.broadcast %cst_50 : f32 to vector<8x128xf32>
    %119 = arith.subf %118, %117 : vector<8x128xf32>
    %cst_51 = arith.constant 0.000000e+00 : f32
    %120 = vector.broadcast %cst_51 : f32 to vector<8x128xf32>
    %121 = arith.maximumf %119, %120 : vector<8x128xf32>
    %c0_52 = arith.constant 0 : index
    %c1 = arith.constant 1 : index
    %c0_53 = arith.constant 0 : index
    %c0_54 = arith.constant 0 : index
    %122 = vector.load %arg3[%c0_52, %c1, %c0_53, %c0_54] : memref<1x3x8x8xf32, #tpu.memory_space<vmem>>, vector<1x1x8x8xf32>
    %123 = vector.shape_cast %122 : vector<1x1x8x8xf32> to vector<8x8xf32>
    %cst_55 = arith.constant dense<0.000000e+00> : vector<8x128xf32>
    %124 = tpu.matmul %123, %113, %cst_55 {dimension_numbers = #tpu.dot_dimension_numbers<[1], [0], [0], [1], [0, 0, 1, 1], [], []>} : vector<8x8xf32>, vector<8x128xf32>, vector<8x128xf32> -> vector<8x128xf32>
    %125 = arith.mulf %124, %121 : vector<8x128xf32>
    %cst_56 = arith.constant dense<0.000000e+00> : vector<128xf32>
    %126 = vector.multi_reduction <add>, %125, %cst_56 [0] : vector<8x128xf32> to vector<128xf32>
    %127 = vector.shape_cast %126 : vector<128xf32> to vector<1x128xf32>
    %128 = arith.addf %67, %127 : vector<1x128xf32>
    %129 = vector.extract_strided_slice %1 {offsets = [1, 0], sizes = [1, 128], strides = [1, 1]} : vector<3x128xf32> to vector<1x128xf32>
    %cst_57 = arith.constant 0.909082651 : f32
    %130 = vector.broadcast %cst_57 : f32 to vector<1x128xf32>
    %131 = arith.mulf %129, %130 : vector<1x128xf32>
    %cst_58 = arith.constant 5.000000e-01 : f32
    %132 = vector.broadcast %cst_58 : f32 to vector<1x128xf32>
    %133 = arith.addf %131, %132 : vector<1x128xf32>
    %cst_59 = arith.constant 1.000000e+00 : f32
    %134 = vector.broadcast %cst_59 : f32 to vector<1x128xf32>
    %135 = arith.cmpf oge, %133, %134 : vector<1x128xf32>
    %cst_60 = arith.constant 0.999989986 : f32
    %136 = vector.broadcast %cst_60 : f32 to vector<1x128xf32>
    %137 = arith.select %135, %136, %133 : vector<1x128xi1>, vector<1x128xf32>
    %cst_61 = arith.constant 0.000000e+00 : f32
    %138 = vector.broadcast %cst_61 : f32 to vector<1x128xf32>
    %139 = arith.cmpf olt, %137, %138 : vector<1x128xf32>
    %cst_62 = arith.constant 0.000000e+00 : f32
    %140 = vector.broadcast %cst_62 : f32 to vector<1x128xf32>
    %141 = arith.select %139, %140, %137 : vector<1x128xi1>, vector<1x128xf32>
    %cst_63 = arith.constant 7.000000e+00 : f32
    %142 = vector.broadcast %cst_63 : f32 to vector<1x128xf32>
    %143 = arith.mulf %141, %142 : vector<1x128xf32>
    %cst_64 = arith.constant 0.000000e+00 : f32
    %cst_65 = arith.constant 7.000000e+00 : f32
    %144 = vector.broadcast %cst_64 : f32 to vector<1x128xf32>
    %145 = arith.maximumf %144, %143 : vector<1x128xf32>
    %146 = vector.broadcast %cst_65 : f32 to vector<1x128xf32>
    %147 = arith.minimumf %146, %145 : vector<1x128xf32>
    %148 = vector.extract_strided_slice %1 {offsets = [2, 0], sizes = [1, 128], strides = [1, 1]} : vector<3x128xf32> to vector<1x128xf32>
    %cst_66 = arith.constant 0.909082651 : f32
    %149 = vector.broadcast %cst_66 : f32 to vector<1x128xf32>
    %150 = arith.mulf %148, %149 : vector<1x128xf32>
    %cst_67 = arith.constant 5.000000e-01 : f32
    %151 = vector.broadcast %cst_67 : f32 to vector<1x128xf32>
    %152 = arith.addf %150, %151 : vector<1x128xf32>
    %cst_68 = arith.constant 1.000000e+00 : f32
    %153 = vector.broadcast %cst_68 : f32 to vector<1x128xf32>
    %154 = arith.cmpf oge, %152, %153 : vector<1x128xf32>
    %cst_69 = arith.constant 0.999989986 : f32
    %155 = vector.broadcast %cst_69 : f32 to vector<1x128xf32>
    %156 = arith.select %154, %155, %152 : vector<1x128xi1>, vector<1x128xf32>
    %cst_70 = arith.constant 0.000000e+00 : f32
    %157 = vector.broadcast %cst_70 : f32 to vector<1x128xf32>
    %158 = arith.cmpf olt, %156, %157 : vector<1x128xf32>
    %cst_71 = arith.constant 0.000000e+00 : f32
    %159 = vector.broadcast %cst_71 : f32 to vector<1x128xf32>
    %160 = arith.select %158, %159, %156 : vector<1x128xi1>, vector<1x128xf32>
    %cst_72 = arith.constant 7.000000e+00 : f32
    %161 = vector.broadcast %cst_72 : f32 to vector<1x128xf32>
    %162 = arith.mulf %160, %161 : vector<1x128xf32>
    %cst_73 = arith.constant 0.000000e+00 : f32
    %cst_74 = arith.constant 7.000000e+00 : f32
    %163 = vector.broadcast %cst_73 : f32 to vector<1x128xf32>
    %164 = arith.maximumf %163, %162 : vector<1x128xf32>
    %165 = vector.broadcast %cst_74 : f32 to vector<1x128xf32>
    %166 = arith.minimumf %165, %164 : vector<1x128xf32>
    %167 = vector.broadcast %3 : vector<8x1xf32> to vector<8x128xf32>
    %168 = vector.broadcast %147 : vector<1x128xf32> to vector<8x128xf32>
    %169 = arith.subf %167, %168 : vector<8x128xf32>
    %170 = math.absf %169 : vector<8x128xf32>
    %cst_75 = arith.constant 1.000000e+00 : f32
    %171 = vector.broadcast %cst_75 : f32 to vector<8x128xf32>
    %172 = arith.subf %171, %170 : vector<8x128xf32>
    %cst_76 = arith.constant 0.000000e+00 : f32
    %173 = vector.broadcast %cst_76 : f32 to vector<8x128xf32>
    %174 = arith.maximumf %172, %173 : vector<8x128xf32>
    %175 = vector.broadcast %5 : vector<8x1xf32> to vector<8x128xf32>
    %176 = vector.broadcast %166 : vector<1x128xf32> to vector<8x128xf32>
    %177 = arith.subf %175, %176 : vector<8x128xf32>
    %178 = math.absf %177 : vector<8x128xf32>
    %cst_77 = arith.constant 1.000000e+00 : f32
    %179 = vector.broadcast %cst_77 : f32 to vector<8x128xf32>
    %180 = arith.subf %179, %178 : vector<8x128xf32>
    %cst_78 = arith.constant 0.000000e+00 : f32
    %181 = vector.broadcast %cst_78 : f32 to vector<8x128xf32>
    %182 = arith.maximumf %180, %181 : vector<8x128xf32>
    %c0_79 = arith.constant 0 : index
    %c2 = arith.constant 2 : index
    %c0_80 = arith.constant 0 : index
    %c0_81 = arith.constant 0 : index
    %183 = vector.load %arg3[%c0_79, %c2, %c0_80, %c0_81] : memref<1x3x8x8xf32, #tpu.memory_space<vmem>>, vector<1x1x8x8xf32>
    %184 = vector.shape_cast %183 : vector<1x1x8x8xf32> to vector<8x8xf32>
    %cst_82 = arith.constant dense<0.000000e+00> : vector<8x128xf32>
    %185 = tpu.matmul %184, %174, %cst_82 {dimension_numbers = #tpu.dot_dimension_numbers<[1], [0], [0], [1], [0, 0, 1, 1], [], []>} : vector<8x8xf32>, vector<8x128xf32>, vector<8x128xf32> -> vector<8x128xf32>
    %186 = arith.mulf %185, %182 : vector<8x128xf32>
    %cst_83 = arith.constant dense<0.000000e+00> : vector<128xf32>
    %187 = vector.multi_reduction <add>, %186, %cst_83 [0] : vector<8x128xf32> to vector<128xf32>
    %188 = vector.shape_cast %187 : vector<128xf32> to vector<1x128xf32>
    %189 = arith.addf %128, %188 : vector<1x128xf32>
    %c0_84 = arith.constant 0 : index
    %c0_85 = arith.constant 0 : index
    %190 = vector.load %arg4[%c0_84, %c0_85] : memref<3x1xf32, #tpu.memory_space<vmem>>, vector<3x1xf32>
    %191 = vector.broadcast %190 : vector<3x1xf32> to vector<3x128xf32>
    %192 = arith.mulf %1, %191 : vector<3x128xf32>
    %cst_86 = arith.constant dense<0.000000e+00> : vector<128xf32>
    %193 = vector.multi_reduction <add>, %192, %cst_86 [0] : vector<3x128xf32> to vector<128xf32>
    %194 = vector.shape_cast %193 : vector<128xf32> to vector<1x128xf32>
    %195 = arith.addf %189, %194 : vector<1x128xf32>
    %c0_87 = arith.constant 0 : index
    %c0_88 = arith.constant 0 : index
    %196 = vector.load %arg5[%c0_87, %c0_88] : memref<1x1xf32, #tpu.memory_space<vmem>>, vector<1x1xf32>
    %197 = vector.broadcast %196 : vector<1x1xf32> to vector<1x128xf32>
    %198 = arith.addf %195, %197 : vector<1x128xf32>
    %c0_89 = arith.constant 0 : index
    %c0_90 = arith.constant 0 : index
    %c0_91 = arith.constant 0 : index
    %199 = vector.load %arg6[%c0_89, %c0_90, %c0_91] : memref<1x1x128xf32, #tpu.memory_space<vmem>>, vector<1x1x128xf32>
    %200 = vector.shape_cast %199 : vector<1x1x128xf32> to vector<1x128xf32>
    %201 = vector.shape_cast %198 : vector<1x128xf32> to vector<1x1x128xf32>
    tpu.vector_store %arg6[%c0_89, %c0_90, %c0_91], %201 {strides = array<i32>} : memref<1x1x128xf32, #tpu.memory_space<vmem>>, vector<1x1x128xf32>,
    return
  }
  func.func @transform_0(%arg0: i32, %arg1: i32) -> (i32, i32, i32) {
    %c0_i32 = arith.constant 0 : i32
    %c0_i32_0 = arith.constant 0 : i32
    return %arg0, %c0_i32, %arg1 : i32, i32, i32
  }
  func.func @transform_1(%arg0: i32, %arg1: i32) -> (i32, i32, i32, i32) {
    %c0_i32 = arith.constant 0 : i32
    %c0_i32_0 = arith.constant 0 : i32
    %c0_i32_1 = arith.constant 0 : i32
    %c0_i32_2 = arith.constant 0 : i32
    return %arg0, %c0_i32, %c0_i32_0, %c0_i32_1 : i32, i32, i32, i32
  }
  func.func @transform_2(%arg0: i32, %arg1: i32) -> (i32, i32) {
    %c0_i32 = arith.constant 0 : i32
    %c0_i32_0 = arith.constant 0 : i32
    %c0_i32_1 = arith.constant 0 : i32
    return %c0_i32, %c0_i32_0 : i32, i32
  }
  func.func @transform_3(%arg0: i32, %arg1: i32) -> (i32, i32) {
    %c0_i32 = arith.constant 0 : i32
    %c0_i32_0 = arith.constant 0 : i32
    %c0_i32_1 = arith.constant 0 : i32
    return %c0_i32, %c0_i32_0 : i32, i32
  }
  func.func @transform_4(%arg0: i32, %arg1: i32) -> (i32, i32, i32) {
    %c0_i32 = arith.constant 0 : i32
    %c0_i32_0 = arith.constant 0 : i32
    return %arg0, %c0_i32, %arg1 : i32, i32, i32
  }
}

</mosaic_0001>

<llo_original>
// kernel: tpu_custom_call.1
$region0: #{tpu_custom_call.1}
  #allocation0 [shape = 'u32[]', space=smem, size = 0x4, offset = 0x4, fixed_abs, tag = 'smem constant byte address 0x4 - core index']
  #allocation1 [shape = 'u32[144,128]{1,0:T(1,128)}', space=vmem, size = 0x12000, scoped, tag = 'internal scratch']
  #allocation2 [shape = 'f32[1,1]{1,0:T(1,128)S(1)}', space=vmem, size = 0x200, scoped, tag = 'scoped memory for tpu_custom_call.1']
  %s0 = inlined_call_operand.vmem [shape: f32[2,3,128], index: 0, kind: input, shape index: {}]
  %s1 = inlined_call_operand.hbm [shape: f32[2,3,8,8], index: 1, kind: input, shape index: {}]
  %s2 = inlined_call_operand.vmem [shape: f32[3,1], index: 2, kind: input, shape index: {}]
  %s3 = inlined_call_operand.<no memory space> [shape: f32[1,1], index: 3, kind: input, shape index: {}]
  %s4 = inlined_call_operand.hbm [shape: f32[2,1,128], index: 4, kind: output, shape index: {}]
  %s5 = sld [smem:[#allocation0]]
  $region53: #{tpu_custom_call.1} parent=0
    _
  %s7 = ssub.s32 1, %s5
  %s8 = scalar_select 0, %s7, %s5
  %v9 = vstv %s3
  %10 = vst [vmem:[#allocation2] sm:$0x1] %v9
  $region1: #{tpu_custom_call.1} parent=0
    #allocation3 [shape = 'u8[24576]{0}', space=vmem, size = 0x6000, scoped, tag = 'input window, operand 1']
    #allocation4 [shape = 's32[2]{0}', space=sflag, size = 0x8, scoped, tag = 'scoped memory for tpu_custom_call.1']
    #allocation5 [shape = 's32[2]{0}', space=sflag, size = 0x8, scoped, tag = 'scoped memory for tpu_custom_call.1']
    #allocation6 [shape = 'u8[1024]{0}', space=vmem, size = 0x400, scoped, tag = 'output window, operand 0']
    %11 = vsyncpa [#allocation4], 0
    %s12 = scalar_lea.sflag [#allocation4], 1
    %13 = vsyncpa %s12, 0
    %14 = vsyncpa [#allocation5], 0
    %s15 = scalar_lea.sflag [#allocation5], 1
    %16 = vsyncpa %s15, 0
    loop: start=0, step=1, limit=4
    $region2: #{tpu_custom_call.1} parent=1 // loop_pre_header
      _
    $region3: #{tpu_custom_call.1} parent=1 // loop_header
      %s18 = sphi 0, %s22
      %p19 = scmp.ge.s32.totalorder %s18, 4
      %s25 = sphi 0, %s37
      %s26 = sphi 0, %s33
      %s27 = sphi 0, %s25
      %s28 = sphi 0, %s26
      %s29 = sphi 0, %s27
      %s30 = sphi 0, %s28
      %s42 = sphi 0, %s44
      %s45 = sphi 0, %s42
      %s46 = sphi 0, %s45
      %s62 = sphi 0, %s46
      %s68 = sphi 0, %s70
      %s71 = sphi 0, %s68
      %s72 = sphi 0, %s71
      %s88 = sphi 0, %s72
      %s92 = sphi 0, %s92
      %s94 = sphi 0, %s92
      %s95 = sphi 0, %s94
      %s109 = sphi 0, %s95
      %s113 = sphi 0, %s113
      %s115 = sphi 0, %s113
      %s116 = sphi 0, %s115
      %s130 = sphi 0, %s116
      %s138 = sphi 0, %s140
      %s141 = sphi 0, %s138
      %s142 = sphi 0, %s141
      %s158 = sphi 0, %s142
    $region4: #{tpu_custom_call.1} parent=1 // loop_header_branch
      %21 = sbr.rel (%p19) target = $region8
    $region5: #{tpu_custom_call.1} parent=1 // loop_body
      %s23 = ssub.s32 %s18, 1
      %s24 = ssub.s32 %s18, 2
      %s31 = sadd.s32 1, %s26
      %p32 = scmp.ge.s32.totalorder %s31, 1
      %s33 = scalar_select %p32, 0, %s31
      %s34 = sadd.s32 1, %s25
      %s35 = scalar_select %p32, %s34, %s25
      %p36 = scmp.ge.s32.totalorder %s35, 2
      %s37 = scalar_select %p36, 0, %s35
      %s38 = ssub.s32 %s25, %s37
      %s39 = ssub.s32 %s26, %s33
      %s40 = sor.u32 %s38, %s39
      %p41 = scmp.eq.s32.totalorder %s40, 0
      %s43 = sadd.s32 %s42, 1
      %s44 = scalar_select %p41, %s42, %s43
      %p47 = pneg %p41
      %p48 = scmp.eq.s32.totalorder %s18, 1
      %p49 = por %p47, %p48
      %p50 = scmp.ne.s32.totalorder %s42, %s45
      %p51 = scmp.eq.s32.totalorder %s18, 0
      %p52 = por %p50, %p51
      %p53 = scmp.ne.s32.totalorder %s42, %s45
      %p54 = scmp.eq.s32.totalorder %s23, 1
      %p55 = por %p53, %p54
      %p56 = scmp.ne.s32.totalorder %s45, %s46
      %p57 = scmp.eq.s32.totalorder %s23, 0
      %p58 = por %p56, %p57
      %p59 = scmp.ne.s32.totalorder %s45, %s46
      %p60 = scmp.eq.s32.totalorder %s24, 1
      %p61 = por %p59, %p60
      %p63 = scmp.ne.s32.totalorder %s46, %s62
      %p64 = scmp.eq.s32.totalorder %s24, 0
      %p65 = por %p63, %p64
      %s66 = ssub.s32 %s25, %s37
      %p67 = scmp.eq.s32.totalorder %s66, 0
      %s69 = sadd.s32 %s68, 1
      %s70 = scalar_select %p67, %s68, %s69
      %p73 = pneg %p67
      %p74 = scmp.eq.s32.totalorder %s18, 1
      %p75 = por %p73, %p74
      %p76 = scmp.ne.s32.totalorder %s68, %s71
      %p77 = scmp.eq.s32.totalorder %s18, 0
      %p78 = por %p76, %p77
      %p79 = scmp.ne.s32.totalorder %s68, %s71
      %p80 = scmp.eq.s32.totalorder %s23, 1
      %p81 = por %p79, %p80
      %p82 = scmp.ne.s32.totalorder %s71, %s72
      %p83 = scmp.eq.s32.totalorder %s23, 0
      %p84 = por %p82, %p83
      %p85 = scmp.ne.s32.totalorder %s71, %s72
      %p86 = scmp.eq.s32.totalorder %s24, 1
      %p87 = por %p85, %p86
      %p89 = scmp.ne.s32.totalorder %s72, %s88
      %p90 = scmp.eq.s32.totalorder %s24, 0
      %p91 = por %p89, %p90
      %s93 = sadd.s32 %s92, 1
      %p96 = scmp.eq.s32.totalorder %s18, 1
      %p97 = scmp.ne.s32.totalorder %s92, %s94
      %p98 = scmp.eq.s32.totalorder %s18, 0
      %p99 = por %p97, %p98
      %p100 = scmp.ne.s32.totalorder %s92, %s94
      %p101 = scmp.eq.s32.totalorder %s23, 1
      %p102 = por %p100, %p101
      %p103 = scmp.ne.s32.totalorder %s94, %s95
      %p104 = scmp.eq.s32.totalorder %s23, 0
      %p105 = por %p103, %p104
      %p106 = scmp.ne.s32.totalorder %s94, %s95
      %p107 = scmp.eq.s32.totalorder %s24, 1
      %p108 = por %p106, %p107
      %p110 = scmp.ne.s32.totalorder %s95, %s109
      %p111 = scmp.eq.s32.totalorder %s24, 0
      %p112 = por %p110, %p111
      %s114 = sadd.s32 %s113, 1
      %p117 = scmp.eq.s32.totalorder %s18, 1
      %p118 = scmp.ne.s32.totalorder %s113, %s115
      %p119 = scmp.eq.s32.totalorder %s18, 0
      %p120 = por %p118, %p119
      %p121 = scmp.ne.s32.totalorder %s113, %s115
      %p122 = scmp.eq.s32.totalorder %s23, 1
      %p123 = por %p121, %p122
      %p124 = scmp.ne.s32.totalorder %s115, %s116
      %p125 = scmp.eq.s32.totalorder %s23, 0
      %p126 = por %p124, %p125
      %p127 = scmp.ne.s32.totalorder %s115, %s116
      %p128 = scmp.eq.s32.totalorder %s24, 1
      %p129 = por %p127, %p128
      %p131 = scmp.ne.s32.totalorder %s116, %s130
      %p132 = scmp.eq.s32.totalorder %s24, 0
      %p133 = por %p131, %p132
      %s134 = ssub.s32 %s25, %s37
      %s135 = ssub.s32 %s26, %s33
      %s136 = sor.u32 %s134, %s135
      %p137 = scmp.eq.s32.totalorder %s136, 0
      %s139 = sadd.s32 %s138, 1
      %s140 = scalar_select %p137, %s138, %s139
      %p143 = pneg %p137
      %p144 = scmp.eq.s32.totalorder %s18, 1
      %p145 = por %p143, %p144
      %p146 = scmp.ne.s32.totalorder %s138, %s141
      %p147 = scmp.eq.s32.totalorder %s18, 0
      %p148 = por %p146, %p147
      %p149 = scmp.ne.s32.totalorder %s138, %s141
      %p150 = scmp.eq.s32.totalorder %s23, 1
      %p151 = por %p149, %p150
      %p152 = scmp.ne.s32.totalorder %s141, %s142
      %p153 = scmp.eq.s32.totalorder %s23, 0
      %p154 = por %p152, %p153
      %p155 = scmp.ne.s32.totalorder %s141, %s142
      %p156 = scmp.eq.s32.totalorder %s24, 1
      %p157 = por %p155, %p156
      %p159 = scmp.ne.s32.totalorder %s142, %s158
      %p160 = scmp.eq.s32.totalorder %s24, 0
      %p161 = por %p159, %p160
      %p162 = scmp.le.s32.totalorder 1, %s18
      %p163 = scmp.lt.s32.totalorder %s18, 3
      %p164 = pnand %p162, %p163
      %p165 = pneg %p164
      // Predicated region
      $region9: #{tpu_custom_call.1} parent=5 // pred_check
        _
      $region10: #{tpu_custom_call.1} parent=5 // pred_check_branch
        %167 = sbr.rel (%p164) target = $region12
      $region11: #{tpu_custom_call.1} parent=5 // pred_region
        %s168 = ssub.s32 %s18, 1
        // Predicated region
        $region13: #{tpu_custom_call.1} parent=11 // pred_check
          %p169 = pneg %p105
        $region14: #{tpu_custom_call.1} parent=11 // pred_check_branch
          %171 = sbr.rel (%p169) target = $region16
        $region15: #{tpu_custom_call.1} parent=11 // pred_region
          _
        $region16: #{tpu_custom_call.1} parent=11 // pred_fallthru
          _
        // Predicated region
        $region17: #{tpu_custom_call.1} parent=11 // pred_check
          %p172 = pneg %p126
        $region18: #{tpu_custom_call.1} parent=11 // pred_check_branch
          %174 = sbr.rel (%p172) target = $region20
        $region19: #{tpu_custom_call.1} parent=11 // pred_region
          _
        $region20: #{tpu_custom_call.1} parent=11 // pred_fallthru
          _
      $region12: #{tpu_custom_call.1} parent=5 // pred_fallthru
        _
      %p175 = scmp.lt.s32.totalorder %s18, 2
      // Predicated region
      $region21: #{tpu_custom_call.1} parent=5 // pred_check
        %p176 = pneg %p175
      $region22: #{tpu_custom_call.1} parent=5 // pred_check_branch
        %178 = sbr.rel (%p176) target = $region24
      $region23: #{tpu_custom_call.1} parent=5 // pred_region
        // Predicated region
        $region25: #{tpu_custom_call.1} parent=23 // pred_check
          %p179 = pneg %p52
        $region26: #{tpu_custom_call.1} parent=23 // pred_check_branch
          %181 = sbr.rel (%p179) target = $region28
        $region27: #{tpu_custom_call.1} parent=23 // pred_region
          %p182 = scmp.lt.s32.totalorder %s25, 1
          %s183 = scalar_select %p182, %s25, 1
          %p184 = scmp.lt.s32.totalorder %s26, 0
          %s185 = scalar_select %p184, %s26, 0
          %s186 = sadd.s32 %s185, %s183
          %s187 = smul.addr %s186, 4
          %s188 = scalar_lea.vmem %s0, %s187
        $region28: #{tpu_custom_call.1} parent=23 // pred_fallthru
          _
        // Predicated region
        $region29: #{tpu_custom_call.1} parent=23 // pred_check
          %p189 = pneg %p78
        $region30: #{tpu_custom_call.1} parent=23 // pred_check_branch
          %191 = sbr.rel (%p189) target = $region32
        $region31: #{tpu_custom_call.1} parent=23 // pred_region
          %s192 = sand.u32 %s68, 1
          %s193 = scalar_lea.sflag [#allocation4], %s192
          %s194 = sand.u32 %s68, 1
          %s195 = smul.addr %s194, 24
          %s196 = scalar_lea.vmem [#allocation3], %s195
          %s198 = ssub.s32 384, 384
          %199 = vsyncadd %s193, %s198
          %s200 = smul.addr %s25, 3
          %s201 = smul.addr %s200, 128
          %s202 = scalar_lea.hbm %s1, %s201
          %s203 = sshll.u32 %s196, 4
          %s204 = int_to_ptr.vmem [resolvable:$true] %s203
          %209 = dma.hbm_to_vmem [thread:$0]  %s202, 384, %s204, %s193, 128, 128, 8
        $region32: #{tpu_custom_call.1} parent=23 // pred_fallthru
          _
      $region24: #{tpu_custom_call.1} parent=5 // pred_fallthru
        _
      %p210 = scmp.le.s32.totalorder 1, %s18
      %p211 = scmp.lt.s32.totalorder %s18, 3
      %p212 = pnand %p210, %p211
      %p213 = pneg %p212
      // Predicated region
      $region33: #{tpu_custom_call.1} parent=5 // pred_check
        _
      $region34: #{tpu_custom_call.1} parent=5 // pred_check_branch
        %215 = sbr.rel (%p212) target = $region36
      $region35: #{tpu_custom_call.1} parent=5 // pred_region
        %s216 = ssub.s32 %s18, 1
        %s217 = sand.u32 %s71, 1
        %s218 = scalar_lea.sflag [#allocation4], %s217
        %s219 = sand.u32 %s71, 1
        %s220 = smul.addr %s219, 24
        %s221 = scalar_lea.vmem [#allocation3], %s220
        // Predicated region
        $region37: #{tpu_custom_call.1} parent=35 // pred_check
          %p222 = pneg %p84
        $region38: #{tpu_custom_call.1} parent=35 // pred_check_branch
          %224 = sbr.rel (%p222) target = $region40
        $region39: #{tpu_custom_call.1} parent=35 // pred_region
          %225 = dma.done %s218, 384
        $region40: #{tpu_custom_call.1} parent=35 // pred_fallthru
          _
        %p226 = scmp.lt.s32.totalorder %s27, 1
        %s227 = scalar_select %p226, %s27, 1
        %p228 = scmp.lt.s32.totalorder %s28, 0
        %s229 = scalar_select %p228, %s28, 0
        %s230 = sadd.s32 %s229, %s227
        %s231 = smul.addr %s230, 4
        %s232 = scalar_lea.vmem %s0, %s231
        %p233 = pneg %p58
        %p234 = pneg %p55
        %s235 = sand.u32 %s71, 1
        %s236 = scalar_lea.sflag [#allocation4], %s235
        %s237 = sand.u32 %s71, 1
        %s238 = smul.addr %s237, 24
        %s239 = scalar_lea.vmem [#allocation3], %s238
        %p240 = pneg %p84
        %p241 = pneg %p81
        %p242 = pneg %p105
        %p243 = pneg %p102
        %p244 = pneg %p126
        %p245 = pneg %p123
        %p246 = pneg %p154
        %p247 = pneg %p151
        %s248 = sand.u32 %s141, 1
        %s249 = scalar_lea.sflag [#allocation5], %s248
        %s250 = sand.u32 %s141, 1
        %s251 = scalar_lea.vmem [#allocation6], %s250
        %p252 = scmp.lt.s32.totalorder %s27, 1
        %s253 = scalar_select %p252, %s27, 1
        %p254 = scmp.lt.s32.totalorder %s28, 0
        %s255 = scalar_select %p254, %s28, 0
        %s256 = sadd.s32 %s255, %s253
        %s257 = smul.addr %s256, 4
        %s258 = scalar_lea.vmem %s0, %s257
        %v259 = vld [vmem:[%s258] sm:$0x7]
        %v260 = vlaneseq
        %v261 = vshrl.u32 %v260, 7
        %v262 = vcvt.s32.f32 %v261
        %v263 = vmul.f32 %v259, 0.90908265
        %v264 = vadd.f32 %v263, 0.5
        %vm265 = vcmp.ge.f32.partialorder %v264, 1.0
        %v266 = vsel %vm265, 0.99999, %v264
        %vm267 = vcmp.lt.f32.partialorder %v266, 0.0
        %v268 = vsel %vm267, 0.0, %v266
        %v269 = vmul.f32 %v268, 7.0
        %v270 = vmax.f32 %v269, 0.0
        %v271 = vmin.f32 %v270, 7.0
        %v272 = vlaneseq
        %v273 = vshrl.u32 %v272, 7
        %v274 = vsub.s32 0, %v273
        %v275 = vrot.slane %v271, %v274
        %v276 = vsub.f32 %v262, %v275
        %v277 = vand.u32 2147483647, %v276
        %v278 = vsub.f32 1.0, %v277
        %v279 = vmax.f32 %v278, 0.0
        %v280 = vlaneseq
        %v281 = vshrl.u32 %v280, 7
        %v282 = vsub.s32 2, %v281
        %v283 = vrot.slane %v271, %v282
        %v284 = vsub.f32 %v262, %v283
        %v285 = vand.u32 2147483647, %v284
        %v286 = vsub.f32 1.0, %v285
        %v287 = vmax.f32 %v286, 0.0
        %v288 = vld [vmem:[%s221] sm:$0xff]
        %vm289 = vcmask 64512
        %v291 = vsel %vm289, %v288, 0
        %293 = vmatprep.subr.mxu0 0.0
        %294 = vmatpush1.msra.mxu0 %v279
        %295 = vmatprep.subr.mxu0 0.0
        %296 = vmatpush1.msra.mxu0 0.0
        %297 = vmatprep.subr.mxu0 0.0
        %298 = vmatpush1.msra.mxu0 0.0
        %299 = vmatprep.subr.mxu0 0.0
        %300 = vmatpush1.msra.mxu0 0.0
        %301 = vmatprep.subr.mxu0 0.0
        %302 = vmatpush1.msra.mxu0 0.0
        %303 = vmatprep.subr.mxu0 0.0
        %304 = vmatpush1.msra.mxu0 0.0
        %305 = vmatprep.subr.mxu0 0.0
        %306 = vmatpush1.msra.mxu0 0.0
        %307 = vmatprep.subr.mxu0 0.0
        %308 = vmatpush1.msra.mxu0 0.0
        %309 = vmatprep.subr.mxu0 0.0
        %310 = vmatpush1.msra.mxu0 0.0
        %311 = vmatprep.subr.mxu0 0.0
        %312 = vmatpush1.msra.mxu0 0.0
        %313 = vmatprep.subr.mxu0 0.0
        %314 = vmatpush1.msra.mxu0 0.0
        %315 = vmatprep.subr.mxu0 0.0
        %316 = vmatpush1.msra.mxu0 0.0
        %317 = vmatprep.subr.mxu0 0.0
        %318 = vmatpush1.msra.mxu0 0.0
        %319 = vmatprep.subr.mxu0 0.0
        %320 = vmatpush1.msra.mxu0 0.0
        %321 = vmatprep.subr.mxu0 0.0
        %322 = vmatpush1.msra.mxu0 0.0
        %323 = vmatprep.subr.mxu0 0.0
        %324 = vmatpush1.msra.mxu0 0.0
        %325 = vmatprep.subr.mxu0 0.0
        %326 = vmatpush1.msra.mxu0 0.0
        %327 = vmatprep.subr.mxu0 0.0
        %328 = vmatpush1.msra.mxu0 0.0
        %329 = vmatprep.subr.mxu0 0.0
        %330 = vmatpush1.msra.mxu0 0.0
        %331 = vmatprep.subr.mxu0 0.0
        %332 = vmatpush1.msra.mxu0 0.0
        %333 = vmatprep.subr.mxu0 0.0
        %334 = vmatpush1.msra.mxu0 0.0
        %335 = vmatprep.subr.mxu0 0.0
        %336 = vmatpush1.msra.mxu0 0.0
        %337 = vmatprep.subr.mxu0 0.0
        %338 = vmatpush1.msra.mxu0 0.0
        %339 = vmatprep.subr.mxu0 0.0
        %340 = vmatpush1.msra.mxu0 0.0
        %341 = vmatprep.subr.mxu0 0.0
        %342 = vmatpush1.msra.mxu0 0.0
        %343 = vmatprep.subr.mxu0 0.0
        %344 = vmatpush1.msra.mxu0 0.0
        %345 = vmatprep.subr.mxu0 0.0
        %346 = vmatpush1.msra.mxu0 0.0
        %347 = vmatprep.subr.mxu0 0.0
        %348 = vmatpush1.msra.mxu0 0.0
        %349 = vmatprep.subr.mxu0 0.0
        %350 = vmatpush1.msra.mxu0 0.0
        %351 = vmatprep.subr.mxu0 0.0
        %352 = vmatpush1.msra.mxu0 0.0
        %353 = vmatprep.subr.mxu0 0.0
        %354 = vmatpush1.msra.mxu0 0.0
        %355 = vmatprep.subr.mxu0 0.0
        %356 = vmatpush1.msra.mxu0 0.0
        %357 = vmatprep.mubr.f32.mxu0 0.0
        %358 = vmatmul.mubr.f32.gmra.mrb[0].mxu0 %v291
        %v359 = vpop.f32.mrb[0].mxu0
        %v360 = vadd.f32 0.0, %v359
        %v361 = vpop.f32.mrb[0].mxu0
        %362 = vdwg.mxu0
        %v363 = vmul.f32 %v360, %v287
        %v364 = vrot.slane %v363, 4
        %v365 = vadd.f32 %v363, %v364
        %v366 = vrot.slane %v365, 2
        %v367 = vadd.f32 %v365, %v366
        %v368 = vrot.slane %v367, 1
        %v369 = vadd.f32 %v367, %v368
        %v370 = vadd.f32 %v369, 0.0
        %v371 = vlaneseq
        %v372 = vshrl.u32 %v371, 7
        %v373 = vsub.s32 1, %v372
        %v374 = vrot.slane %v271, %v373
        %v375 = vsub.f32 %v262, %v374
        %v376 = vand.u32 2147483647, %v375
        %v377 = vsub.f32 1.0, %v376
        %v378 = vmax.f32 %v377, 0.0
        %s379 = scalar_lea.vmem %s221, 8 [#allocation3]
        %v380 = vld [vmem:[%s379] sm:$0xff]
        %v382 = vsel %vm289, %v380, 0
        %384 = vmatprep.subr.mxu0 0.0
        %385 = vmatpush1.msra.mxu0 %v279
        %386 = vmatprep.subr.mxu0 0.0
        %387 = vmatpush1.msra.mxu0 0.0
        %388 = vmatprep.subr.mxu0 0.0
        %389 = vmatpush1.msra.mxu0 0.0
        %390 = vmatprep.subr.mxu0 0.0
        %391 = vmatpush1.msra.mxu0 0.0
        %392 = vmatprep.subr.mxu0 0.0
        %393 = vmatpush1.msra.mxu0 0.0
        %394 = vmatprep.subr.mxu0 0.0
        %395 = vmatpush1.msra.mxu0 0.0
        %396 = vmatprep.subr.mxu0 0.0
        %397 = vmatpush1.msra.mxu0 0.0
        %398 = vmatprep.subr.mxu0 0.0
        %399 = vmatpush1.msra.mxu0 0.0
        %400 = vmatprep.subr.mxu0 0.0
        %401 = vmatpush1.msra.mxu0 0.0
        %402 = vmatprep.subr.mxu0 0.0
        %403 = vmatpush1.msra.mxu0 0.0
        %404 = vmatprep.subr.mxu0 0.0
        %405 = vmatpush1.msra.mxu0 0.0
        %406 = vmatprep.subr.mxu0 0.0
        %407 = vmatpush1.msra.mxu0 0.0
        %408 = vmatprep.subr.mxu0 0.0
        %409 = vmatpush1.msra.mxu0 0.0
        %410 = vmatprep.subr.mxu0 0.0
        %411 = vmatpush1.msra.mxu0 0.0
        %412 = vmatprep.subr.mxu0 0.0
        %413 = vmatpush1.msra.mxu0 0.0
        %414 = vmatprep.subr.mxu0 0.0
        %415 = vmatpush1.msra.mxu0 0.0
        %416 = vmatprep.subr.mxu0 0.0
        %417 = vmatpush1.msra.mxu0 0.0
        %418 = vmatprep.subr.mxu0 0.0
        %419 = vmatpush1.msra.mxu0 0.0
        %420 = vmatprep.subr.mxu0 0.0
        %421 = vmatpush1.msra.mxu0 0.0
        %422 = vmatprep.subr.mxu0 0.0
        %423 = vmatpush1.msra.mxu0 0.0
        %424 = vmatprep.subr.mxu0 0.0
        %425 = vmatpush1.msra.mxu0 0.0
        %426 = vmatprep.subr.mxu0 0.0
        %427 = vmatpush1.msra.mxu0 0.0
        %428 = vmatprep.subr.mxu0 0.0
        %429 = vmatpush1.msra.mxu0 0.0
        %430 = vmatprep.subr.mxu0 0.0
        %431 = vmatpush1.msra.mxu0 0.0
        %432 = vmatprep.subr.mxu0 0.0
        %433 = vmatpush1.msra.mxu0 0.0
        %434 = vmatprep.subr.mxu0 0.0
        %435 = vmatpush1.msra.mxu0 0.0
        %436 = vmatprep.subr.mxu0 0.0
        %437 = vmatpush1.msra.mxu0 0.0
        %438 = vmatprep.subr.mxu0 0.0
        %439 = vmatpush1.msra.mxu0 0.0
        %440 = vmatprep.subr.mxu0 0.0
        %441 = vmatpush1.msra.mxu0 0.0
        %442 = vmatprep.subr.mxu0 0.0
        %443 = vmatpush1.msra.mxu0 0.0
        %444 = vmatprep.subr.mxu0 0.0
        %445 = vmatpush1.msra.mxu0 0.0
        %446 = vmatprep.subr.mxu0 0.0
        %447 = vmatpush1.msra.mxu0 0.0
        %448 = vmatprep.mubr.f32.mxu0 0.0
        %449 = vmatmul.mubr.f32.gmra.mrb[0].mxu0 %v382
        %v450 = vpop.f32.mrb[0].mxu0
        %v451 = vadd.f32 0.0, %v450
        %v452 = vpop.f32.mrb[0].mxu0
        %453 = vdwg.mxu0
        %v454 = vmul.f32 %v451, %v378
        %v455 = vrot.slane %v454, 4
        %v456 = vadd.f32 %v454, %v455
        %v457 = vrot.slane %v456, 2
        %v458 = vadd.f32 %v456, %v457
        %v459 = vrot.slane %v458, 1
        %v460 = vadd.f32 %v458, %v459
        %v461 = vadd.f32 %v370, %v460
        %s462 = scalar_lea.vmem %s221, 16 [#allocation3]
        %v463 = vld [vmem:[%s462] sm:$0xff]
        %v465 = vsel %vm289, %v463, 0
        %467 = vmatprep.subr.mxu0 0.0
        %468 = vmatpush1.msra.mxu0 %v378
        %469 = vmatprep.subr.mxu0 0.0
        %470 = vmatpush1.msra.mxu0 0.0
        %471 = vmatprep.subr.mxu0 0.0
        %472 = vmatpush1.msra.mxu0 0.0
        %473 = vmatprep.subr.mxu0 0.0
        %474 = vmatpush1.msra.mxu0 0.0
        %475 = vmatprep.subr.mxu0 0.0
        %476 = vmatpush1.msra.mxu0 0.0
        %477 = vmatprep.subr.mxu0 0.0
        %478 = vmatpush1.msra.mxu0 0.0
        %479 = vmatprep.subr.mxu0 0.0
        %480 = vmatpush1.msra.mxu0 0.0
        %481 = vmatprep.subr.mxu0 0.0
        %482 = vmatpush1.msra.mxu0 0.0
        %483 = vmatprep.subr.mxu0 0.0
        %484 = vmatpush1.msra.mxu0 0.0
        %485 = vmatprep.subr.mxu0 0.0
        %486 = vmatpush1.msra.mxu0 0.0
        %487 = vmatprep.subr.mxu0 0.0
        %488 = vmatpush1.msra.mxu0 0.0
        %489 = vmatprep.subr.mxu0 0.0
        %490 = vmatpush1.msra.mxu0 0.0
        %491 = vmatprep.subr.mxu0 0.0
        %492 = vmatpush1.msra.mxu0 0.0
        %493 = vmatprep.subr.mxu0 0.0
        %494 = vmatpush1.msra.mxu0 0.0
        %495 = vmatprep.subr.mxu0 0.0
        %496 = vmatpush1.msra.mxu0 0.0
        %497 = vmatprep.subr.mxu0 0.0
        %498 = vmatpush1.msra.mxu0 0.0
        %499 = vmatprep.subr.mxu0 0.0
        %500 = vmatpush1.msra.mxu0 0.0
        %501 = vmatprep.subr.mxu0 0.0
        %502 = vmatpush1.msra.mxu0 0.0
        %503 = vmatprep.subr.mxu0 0.0
        %504 = vmatpush1.msra.mxu0 0.0
        %505 = vmatprep.subr.mxu0 0.0
        %506 = vmatpush1.msra.mxu0 0.0
        %507 = vmatprep.subr.mxu0 0.0
        %508 = vmatpush1.msra.mxu0 0.0
        %509 = vmatprep.subr.mxu0 0.0
        %510 = vmatpush1.msra.mxu0 0.0
        %511 = vmatprep.subr.mxu0 0.0
        %512 = vmatpush1.msra.mxu0 0.0
        %513 = vmatprep.subr.mxu0 0.0
        %514 = vmatpush1.msra.mxu0 0.0
        %515 = vmatprep.subr.mxu0 0.0
        %516 = vmatpush1.msra.mxu0 0.0
        %517 = vmatprep.subr.mxu0 0.0
        %518 = vmatpush1.msra.mxu0 0.0
        %519 = vmatprep.subr.mxu0 0.0
        %520 = vmatpush1.msra.mxu0 0.0
        %521 = vmatprep.subr.mxu0 0.0
        %522 = vmatpush1.msra.mxu0 0.0
        %523 = vmatprep.subr.mxu0 0.0
        %524 = vmatpush1.msra.mxu0 0.0
        %525 = vmatprep.subr.mxu0 0.0
        %526 = vmatpush1.msra.mxu0 0.0
        %527 = vmatprep.subr.mxu0 0.0
        %528 = vmatpush1.msra.mxu0 0.0
        %529 = vmatprep.subr.mxu0 0.0
        %530 = vmatpush1.msra.mxu0 0.0
        %531 = vmatprep.mubr.f32.mxu0 0.0
        %532 = vmatmul.mubr.f32.gmra.mrb[0].mxu0 %v465
        %v533 = vpop.f32.mrb[0].mxu0
        %v534 = vadd.f32 0.0, %v533
        %v535 = vpop.f32.mrb[0].mxu0
        %536 = vdwg.mxu0
        %v537 = vmul.f32 %v534, %v287
        %v538 = vrot.slane %v537, 4
        %v539 = vadd.f32 %v537, %v538
        %v540 = vrot.slane %v539, 2
        %v541 = vadd.f32 %v539, %v540
        %v542 = vrot.slane %v541, 1
        %v543 = vadd.f32 %v541, %v542
        %v544 = vadd.f32 %v461, %v543
        %v545 = vld [vmem:[%s2] sm:$0x7]
        %547 = vset.pattern.permute.xlu0 0
        %548 = vperm.xlu0 %547, %v545
        %v549 = vpop.permute.xlu0 %548
        %v551 = vmul.f32 %v259, %v549
        %vm552 = vcmask 1042432
        %v553 = vsel %vm552, %v551, 0.0
        %v554 = vrot.slane %v553, 4
        %v555 = vadd.f32 %v553, %v554
        %v556 = vrot.slane %v555, 2
        %v557 = vadd.f32 %v555, %v556
        %v558 = vrot.slane %v557, 1
        %v559 = vadd.f32 %v557, %v558
        %v560 = vadd.f32 %v544, %v559
        %v561 = vld [vmem:[#allocation2] sm:$0x1]
        %563 = vset.pattern.permute.xlu0 0
        %564 = vperm.xlu0 %563, %v561
        %v565 = vpop.permute.xlu0 %564
        %v567 = vlaneseq
        %v568 = vshrl.u32 %v567, 7
        %v569 = vsub.s32 0, %v568
        %v570 = vrot.slane %v565, %v569
        %v571 = vadd.f32 %v560, %v570
        %572 = vst [vmem:[%s251] sm:$0x1] %v571
        %s573 = sand.u32 %s141, 1
        %s574 = scalar_lea.sflag [#allocation5], %s573
        %s575 = sand.u32 %s141, 1
        %s576 = scalar_lea.vmem [#allocation6], %s575
        // Predicated region
        $region41: #{tpu_custom_call.1} parent=35 // pred_check
          %p577 = pneg %p151
        $region42: #{tpu_custom_call.1} parent=35 // pred_check_branch
          %579 = sbr.rel (%p577) target = $region44
        $region43: #{tpu_custom_call.1} parent=35 // pred_region
          %s581 = ssub.s32 16, 16
          %582 = vsyncadd %s574, %s581
          %s583 = sadd.s32 %s28, %s27
          %s584 = smul.addr %s583, 16
          %s585 = scalar_lea.hbm %s4, %s584
          %s587 = sshll.u32 %s576, 4
          %s588 = int_to_ptr.vmem [resolvable:$true] %s587
          %590 = dma.vmem_to_hbm [thread:$0]  %s588, 16, %s585, %s574
        $region44: #{tpu_custom_call.1} parent=35 // pred_fallthru
          _
      $region36: #{tpu_custom_call.1} parent=5 // pred_fallthru
        _
      %p591 = scmp.le.s32.totalorder 2, %s18
      // Predicated region
      $region45: #{tpu_custom_call.1} parent=5 // pred_check
        %p592 = pneg %p591
      $region46: #{tpu_custom_call.1} parent=5 // pred_check_branch
        %594 = sbr.rel (%p592) target = $region48
      $region47: #{tpu_custom_call.1} parent=5 // pred_region
        %s595 = ssub.s32 %s18, 2
        // Predicated region
        $region49: #{tpu_custom_call.1} parent=47 // pred_check
          %p596 = pneg %p157
        $region50: #{tpu_custom_call.1} parent=47 // pred_check_branch
          %598 = sbr.rel (%p596) target = $region52
        $region51: #{tpu_custom_call.1} parent=47 // pred_region
          %s599 = sand.u32 %s142, 1
          %s600 = scalar_lea.sflag [#allocation5], %s599
          %s601 = sand.u32 %s142, 1
          %s602 = scalar_lea.vmem [#allocation6], %s601
          %603 = dma.done %s600, 16
        $region52: #{tpu_custom_call.1} parent=47 // pred_fallthru
          _
      $region48: #{tpu_custom_call.1} parent=5 // pred_fallthru
        _
    $region6: #{tpu_custom_call.1} parent=1 // loop_footer
      %s22 = sadd.s32 1, %s18
    $region7: #{tpu_custom_call.1} parent=1 // loop_footer_branch
      %17 = sbr.rel target = $region3
    $region8: #{tpu_custom_call.1} parent=1 // loop_exit
      _
    %604 = vsyncpa [#allocation4], 1
    %s605 = scalar_lea.sflag [#allocation4], 1
    %606 = vsyncpa %s605, 1
    %607 = vsyncpa [#allocation5], 1
    %s608 = scalar_lea.sflag [#allocation5], 1
    %609 = vsyncpa %s608, 1

</llo_original>
